<compile_context>
chip_gen: v7x
topology: tpu7x:2x2x1
jax: 0.10.0
libtpu: 0.0.40
codegen_flags: <defaults>
</compile_context>

<pallas_src>
import functools

import jax
import jax.numpy as jnp
from jax import lax
from jax.experimental import pallas as pl
from jax.experimental.pallas import tpu as pltpu


def _kd_loss_kernel(s_ref, t_ref, o_ref, *, temperature: float, batch: int):
    tile_rows = s_ref.shape[0]
    inv_t = 1.0 / temperature

    s = s_ref[...].astype(jnp.float32) * inv_t   # student logits / T
    t = t_ref[...].astype(jnp.float32) * inv_t   # teacher logits / T

    # Mask rows past the true batch size (ragged last tile).  With both rows
    # forced to zero, that row's KL term is exactly 0.
    if batch % tile_rows != 0:
        row0 = pl.program_id(0) * tile_rows
        row_ids = row0 + lax.broadcasted_iota(jnp.int32, (tile_rows, 1), 0)
        valid = row_ids < batch
        s = jnp.where(valid, s, 0.0)
        t = jnp.where(valid, t, 0.0)

    # Stable softmax statistics along the class (lane) axis.
    s_shift = s - jnp.max(s, axis=1, keepdims=True)
    t_shift = t - jnp.max(t, axis=1, keepdims=True)
    z_s = jnp.sum(jnp.exp(s_shift), axis=1, keepdims=True)      # (tile, 1)
    exp_t = jnp.exp(t_shift)                                    # (tile, C)
    z_t = jnp.sum(exp_t, axis=1, keepdims=True)                 # (tile, 1)

    # sum_c p_t * (log_p_t - log_p_s)
    #   = (1/z_t) * sum_c exp_t * ((t_shift - s_shift) + (log z_s - log z_t))
    log_ratio = jnp.log(z_s) - jnp.log(z_t)                     # (tile, 1)
    diff = (t_shift - s_shift) + log_ratio                      # (tile, C)
    row_num = jnp.sum(exp_t * diff, axis=1, keepdims=True)      # (tile, 1)
    row_kl = row_num * pl.reciprocal(z_t, approx=True)          # (tile, 1)

    # Per-tile partial sum, broadcast into the lane-dense output block
    # (unmasked full-width store; final tiny reduce happens in the wrapper).
    partial = jnp.sum(row_kl, axis=0, keepdims=True)            # (1, 1)
    o_ref[...] = jnp.broadcast_to(partial, o_ref.shape)


def kd_loss(out_s: jax.Array, out_t: jax.Array, temperature: float,
            *, tile_b: int | None = None) -> jax.Array:
    """Pallas implementation of KDLoss(T)(out_s, out_t). Inputs are (B, C) logits."""
    assert out_s.shape == out_t.shape and out_s.ndim == 2
    B, C = out_s.shape
    itemsize = max(jnp.dtype(out_s.dtype).itemsize, jnp.dtype(out_t.dtype).itemsize)

    # Row-tile sizing: ~2 MiB per pipelined input buffer, rows a multiple of
    # 8 (sublane tiling).  Small batches collapse to a single full block.
    if tile_b is None:
        budget = 2 << 20
        tile_b = max(8, min(512, (budget // max(1, C * itemsize)) // 8 * 8))
    if B <= tile_b:
        tile_b = B
        num_blocks = 1
    else:
        tile_b = max(8, (tile_b // 8) * 8)
        num_blocks = pl.cdiv(B, tile_b)

    # VMEM budget: 2 inputs x 2 pipeline buffers + ~8 f32 temporaries/tile,
    # plus headroom.  Clamped to stay safe on v7x's 64 MiB physical VMEM.
    in_tile_bytes = tile_b * C * itemsize
    tmp_tile_bytes = tile_b * C * 4
    vmem_limit = 4 * in_tile_bytes + 8 * tmp_tile_bytes + (2 << 20)
    vmem_limit = int(min(56 << 20, max(32 << 20, vmem_limit)))

    cost = pl.CostEstimate(
        flops=10 * B * C,
        transcendentals=2 * B * C,
        bytes_accessed=2 * B * C * itemsize + num_blocks * 8 * 128 * 4,
    )

    kernel = functools.partial(
        _kd_loss_kernel, temperature=float(temperature), batch=B
    )

    partials = pl.pallas_call(
        kernel,
        out_shape=jax.ShapeDtypeStruct((num_blocks * 8, 128), jnp.float32),
        grid_spec=pltpu.PrefetchScalarGridSpec(
            num_scalar_prefetch=0,
            grid=(num_blocks,),
            in_specs=[
                pl.BlockSpec((tile_b, C), lambda i: (i, 0)),
                pl.BlockSpec((tile_b, C), lambda i: (i, 0)),
            ],
            out_specs=pl.BlockSpec((8, 128), lambda i: (i, 0)),
        ),
        compiler_params=pltpu.CompilerParams(
            dimension_semantics=("parallel",),
            vmem_limit_bytes=vmem_limit,
        ),
        cost_estimate=cost,
    )(out_s, out_t)

    # Final tiny reduce + batchmean * T^2 scaling in plain JAX.
    per_block = partials.reshape(num_blocks, 8, 128)[:, 0, 0]
    T = float(temperature)
    return jnp.sum(per_block) * (T * T / float(B))


def kd_loss_ref(out_s, out_t, temperature):
    """Pure-JAX reference matching F.kl_div(log_softmax, softmax, 'batchmean') * T^2."""
    T = float(temperature)
    s = out_s.astype(jnp.float32) / T
    t = out_t.astype(jnp.float32) / T
    log_p_s = jax.nn.log_softmax(s, axis=1)
    p_t = jax.nn.softmax(t, axis=1)
    log_p_t = jax.nn.log_softmax(t, axis=1)
    return jnp.sum(p_t * (log_p_t - log_p_s)) / out_s.shape[0] * T * T


if __name__ == "__main__":
    key = jax.random.PRNGKey(0)
    T = 4.0  # distillation temperature (from KDLoss.__init__)

    # Test 1: small classification logits (B=8, C=32, f32) — single block,
    # C not a multiple of 128 (exercises lane padding in axis=1 reductions).
    k1, k2, k3, k4 = jax.random.split(key, 4)
    s1 = jax.random.normal(k1, (8, 32), dtype=jnp.float32)
    t1 = jax.random.normal(k2, (8, 32), dtype=jnp.float32)
    loss1 = kd_loss(s1, t1, T)
    jax.block_until_ready(loss1)
    ref1 = kd_loss_ref(s1, t1, T)
    assert jnp.allclose(loss1, ref1, rtol=5e-3, atol=1e-5), (loss1, ref1)

    # Test 2: bf16 inputs, forced multi-block grid with a ragged last tile
    # (B=36, tile_b=16 -> 3 grid steps, last tile row-masked).
    s2 = jax.random.normal(k3, (36, 384), dtype=jnp.bfloat16)
    t2 = jax.random.normal(k4, (36, 384), dtype=jnp.bfloat16)
    loss2 = kd_loss(s2, t2, T, tile_b=16)
    jax.block_until_ready(loss2)
    ref2 = kd_loss_ref(s2, t2, T)
    assert jnp.allclose(loss2, ref2, rtol=5e-3, atol=1e-5), (loss2, ref2)

    print("KERNEL_OK")
</pallas_src>

<mosaic_0001>
module attributes {stable_mosaic.version = 11 : i64} {
  func.func @_kd_loss_kernel(%arg0: i32, %arg1: memref<8x32xf32, #tpu.memory_space<vmem>>, %arg2: memref<8x32xf32, #tpu.memory_space<vmem>>, %arg3: memref<8x128xf32, #tpu.memory_space<vmem>>) attributes {dimension_semantics = [#tpu.dimension_semantics<parallel>], iteration_bounds = array<i64: 1>, scalar_prefetch = 0 : i64, scratch_operands = 0 : i64, tpu.core_type = #tpu.core_type<tc>, window_params = [{transform_indices = @transform_0, window_bounds = array<i64: 8, 32>}, {transform_indices = @transform_1, window_bounds = array<i64: 8, 32>}, {transform_indices = @transform_2, window_bounds = array<i64: 8, 128>}]} {
    %c0 = arith.constant 0 : index
    %c0_0 = arith.constant 0 : index
    %0 = vector.load %arg1[%c0, %c0_0] : memref<8x32xf32, #tpu.memory_space<vmem>>, vector<8x32xf32>
    %cst = arith.constant 2.500000e-01 : f32
    %1 = vector.broadcast %cst : f32 to vector<8x32xf32>
    %2 = arith.mulf %0, %1 : vector<8x32xf32>
    %c0_1 = arith.constant 0 : index
    %c0_2 = arith.constant 0 : index
    %3 = vector.load %arg2[%c0_1, %c0_2] : memref<8x32xf32, #tpu.memory_space<vmem>>, vector<8x32xf32>
    %cst_3 = arith.constant 2.500000e-01 : f32
    %4 = vector.broadcast %cst_3 : f32 to vector<8x32xf32>
    %5 = arith.mulf %3, %4 : vector<8x32xf32>
    %cst_4 = arith.constant dense<0xFF800000> : vector<8xf32>
    %6 = vector.multi_reduction <maximumf>, %2, %cst_4 [1] : vector<8x32xf32> to vector<8xf32>
    %7 = vector.shape_cast %6 : vector<8xf32> to vector<8x1xf32>
    %8 = vector.broadcast %7 : vector<8x1xf32> to vector<8x32xf32>
    %9 = arith.subf %2, %8 : vector<8x32xf32>
    %cst_5 = arith.constant dense<0xFF800000> : vector<8xf32>
    %10 = vector.multi_reduction <maximumf>, %5, %cst_5 [1] : vector<8x32xf32> to vector<8xf32>
    %11 = vector.shape_cast %10 : vector<8xf32> to vector<8x1xf32>
    %12 = vector.broadcast %11 : vector<8x1xf32> to vector<8x32xf32>
    %13 = arith.subf %5, %12 : vector<8x32xf32>
    %14 = math.exp %9 : vector<8x32xf32>
    %cst_6 = arith.constant dense<0.000000e+00> : vector<8xf32>
    %15 = vector.multi_reduction <add>, %14, %cst_6 [1] : vector<8x32xf32> to vector<8xf32>
    %16 = vector.shape_cast %15 : vector<8xf32> to vector<8x1xf32>
    %17 = math.exp %13 : vector<8x32xf32>
    %cst_7 = arith.constant dense<0.000000e+00> : vector<8xf32>
    %18 = vector.multi_reduction <add>, %17, %cst_7 [1] : vector<8x32xf32> to vector<8xf32>
    %19 = vector.shape_cast %18 : vector<8xf32> to vector<8x1xf32>
    %20 = math.log %16 : vector<8x1xf32>
    %21 = math.log %19 : vector<8x1xf32>
    %22 = arith.subf %20, %21 : vector<8x1xf32>
    %23 = arith.subf %13, %9 : vector<8x32xf32>
    %24 = vector.broadcast %22 : vector<8x1xf32> to vector<8x32xf32>
    %25 = arith.addf %23, %24 : vector<8x32xf32>
    %26 = arith.mulf %17, %25 : vector<8x32xf32>
    %cst_8 = arith.constant dense<0.000000e+00> : vector<8xf32>
    %27 = vector.multi_reduction <add>, %26, %cst_8 [1] : vector<8x32xf32> to vector<8xf32>
    %28 = vector.shape_cast %27 : vector<8xf32> to vector<8x1xf32>
    %29 = tpu.reciprocal %19 {approx = true} : vector<8x1xf32> -> vector<8x1xf32>
    %30 = arith.mulf %28, %29 : vector<8x1xf32>
    %cst_9 = arith.constant dense<0.000000e+00> : vector<1xf32>
    %31 = vector.multi_reduction <add>, %30, %cst_9 [0] : vector<8x1xf32> to vector<1xf32>
    %32 = vector.shape_cast %31 : vector<1xf32> to vector<1x1xf32>
    %33 = vector.shape_cast %32 : vector<1x1xf32> to vector<1x1xf32>
    %34 = vector.broadcast %33 : vector<1x1xf32> to vector<8x128xf32>
    %c0_10 = arith.constant 0 : index
    %c0_11 = arith.constant 0 : index
    %35 = vector.load %arg3[%c0_10, %c0_11] : memref<8x128xf32, #tpu.memory_space<vmem>>, vector<8x128xf32>
    tpu.vector_store %arg3[%c0_10, %c0_11], %34 {strides = array<i32>} : memref<8x128xf32, #tpu.memory_space<vmem>>, vector<8x128xf32>,
    return
  }
  func.func @transform_0(%arg0: i32) -> (i32, i32) {
    %c0_i32 = arith.constant 0 : i32
    %c0_i32_0 = arith.constant 0 : i32
    return %arg0, %c0_i32 : i32, i32
  }
  func.func @transform_1(%arg0: i32) -> (i32, i32) {
    %c0_i32 = arith.constant 0 : i32
    %c0_i32_0 = arith.constant 0 : i32
    return %arg0, %c0_i32 : i32, i32
  }
  func.func @transform_2(%arg0: i32) -> (i32, i32) {
    %c0_i32 = arith.constant 0 : i32
    %c0_i32_0 = arith.constant 0 : i32
    return %arg0, %c0_i32 : i32, i32
  }
}

</mosaic_0001>

<llo_original>
// kernel: tpu_custom_call.1
$region0: #{tpu_custom_call.1}
  #allocation0 [shape = 'u32[]', space=smem, size = 0x4, offset = 0x4, fixed_abs, tag = 'smem constant byte address 0x4 - core index']
  #allocation1 [shape = 'u32[144,128]{1,0:T(1,128)}', space=vmem, size = 0x12000, scoped, tag = 'internal scratch']
  %s0 = inlined_call_operand.hbm [shape: f32[8,32], index: 0, kind: input, shape index: {}]
  %s1 = inlined_call_operand.hbm [shape: f32[8,32], index: 1, kind: input, shape index: {}]
  %s2 = inlined_call_operand.hbm [shape: f32[8,128], index: 2, kind: output, shape index: {}]
  %s3 = sld [smem:[#allocation0]]
  $region26: #{tpu_custom_call.1} parent=0
    _
  %s5 = ssub.s32 1, %s3
  %s6 = scalar_select 0, %s5, %s3
  $region1: #{tpu_custom_call.1} parent=0
    #allocation2 [shape = 'u8[4096]{0}', space=vmem, size = 0x1000, scoped, tag = 'input window, operand 0, single buffered']
    #allocation3 [shape = 's32[1]{0}', space=sflag, size = 0x4, scoped, tag = 'scoped memory for tpu_custom_call.1']
    #allocation4 [shape = 's32[1]{0}', space=sflag, size = 0x4, scoped, tag = 'scoped memory for tpu_custom_call.1']
    #allocation5 [shape = 'u8[4096]{0}', space=vmem, size = 0x1000, scoped, tag = 'input window, operand 1, single buffered']
    #allocation6 [shape = 's32[1]{0}', space=sflag, size = 0x4, scoped, tag = 'scoped memory for tpu_custom_call.1']
    #allocation7 [shape = 'u8[4096]{0}', space=vmem, size = 0x1000, scoped, tag = 'output window, operand 0, single buffered']
    %7 = vsyncpa [#allocation3], 0
    %8 = vsyncpa [#allocation6], 0
    %9 = vsyncpa [#allocation4], 0
    // Predicated region
    $region2: #{tpu_custom_call.1} parent=1 // pred_check
      _
    $region3: #{tpu_custom_call.1} parent=1 // pred_check_branch
      %11 = sbr.rel (0) target = $region5
    $region4: #{tpu_custom_call.1} parent=1 // pred_region
      %s13 = ssub.s32 128, 128
      %14 = vsyncadd [#allocation3], %s13
      %s16 = sshll.u32 [#allocation2], 4
      %s17 = int_to_ptr.vmem [resolvable:$true] %s16
      %19 = dma.hbm_to_vmem [thread:$0]  %s0, 128, %s17, [#allocation3]
    $region5: #{tpu_custom_call.1} parent=1 // pred_fallthru
      _
    // Predicated region
    $region6: #{tpu_custom_call.1} parent=1 // pred_check
      _
    $region7: #{tpu_custom_call.1} parent=1 // pred_check_branch
      %21 = sbr.rel (0) target = $region9
    $region8: #{tpu_custom_call.1} parent=1 // pred_region
      %s23 = ssub.s32 128, 128
      %24 = vsyncadd [#allocation6], %s23
      %s26 = sshll.u32 [#allocation5], 4
      %s27 = int_to_ptr.vmem [resolvable:$true] %s26
      %29 = dma.hbm_to_vmem [thread:$0]  %s1, 128, %s27, [#allocation6]
    $region9: #{tpu_custom_call.1} parent=1 // pred_fallthru
      _
    // Predicated region
    $region10: #{tpu_custom_call.1} parent=1 // pred_check
      _
    $region11: #{tpu_custom_call.1} parent=1 // pred_check_branch
      %31 = sbr.rel (0) target = $region13
    $region12: #{tpu_custom_call.1} parent=1 // pred_region
      %32 = dma.done [#allocation3], 128
    $region13: #{tpu_custom_call.1} parent=1 // pred_fallthru
      _
    // Predicated region
    $region14: #{tpu_custom_call.1} parent=1 // pred_check
      _
    $region15: #{tpu_custom_call.1} parent=1 // pred_check_branch
      %34 = sbr.rel (0) target = $region17
    $region16: #{tpu_custom_call.1} parent=1 // pred_region
      %35 = dma.done [#allocation6], 128
    $region17: #{tpu_custom_call.1} parent=1 // pred_fallthru
      _
    %v36 = vld [vmem:[#allocation2] sm:$0xff]
    %v37 = vmul.f32 %v36, 0.25
    %v38 = vld [vmem:[#allocation5] sm:$0xff]
    %v39 = vmul.f32 %v38, 0.25
    %vm40 = vcmask 261120
    %v41 = vsel %vm40, %v37, -inf
    %42 = vmax.xlane.f32.xlu0 %v41
    %v43 = vpop.xlane.xlu0 %42
    %v44 = vsub.f32 %v37, %v43
    %v45 = vsel %vm40, %v39, -inf
    %46 = vmax.xlane.f32.xlu0 %v45
    %v47 = vpop.xlane.xlu0 %46
    %v48 = vsub.f32 %v39, %v47
    %v49 = vmul.f32 %v44, 1.442695
    %v50 = vpow.pop %v49
    %v51 = vsel %vm40, %v50, 0.0
    %52 = vadd.xlane.f32.xlu0 %v51
    %v53 = vpop.xlane.xlu0 %52
    %v54 = vmul.f32 %v48, 1.442695
    %v55 = vpow.pop %v54
    %v56 = vsel %vm40, %v55, 0.0
    %57 = vadd.xlane.f32.xlu0 %v56
    %v58 = vpop.xlane.xlu0 %57
    %v59 = vlog2.pop %v53
    %v60 = vmul.f32 %v59, 0.6931472
    %v61 = vlog2.pop %v58
    %v62 = vmul.f32 %v61, 0.6931472
    %v63 = vsub.f32 %v60, %v62
    %v64 = vsub.f32 %v48, %v44
    %v65 = vadd.f32 %v64, %v63
    %v66 = vmul.f32 %v55, %v65
    %v67 = vsel %vm40, %v66, 0.0
    %68 = vadd.xlane.f32.xlu0 %v67
    %v69 = vpop.xlane.xlu0 %68
    %v70 = vrcp.pop %v58
    %v71 = vmul.f32 %v69, %v70
    %v72 = vrot.slane %v71, 4
    %v73 = vadd.f32 %v71, %v72
    %v74 = vrot.slane %v73, 2
    %v75 = vadd.f32 %v73, %v74
    %v76 = vrot.slane %v75, 1
    %v77 = vadd.f32 %v75, %v76
    %78 = vst [vmem:[#allocation7] sm:$0xff] %v77
    // Predicated region
    $region18: #{tpu_custom_call.1} parent=1 // pred_check
      _
    $region19: #{tpu_custom_call.1} parent=1 // pred_check_branch
      %80 = sbr.rel (0) target = $region21
    $region20: #{tpu_custom_call.1} parent=1 // pred_region
      %s82 = ssub.s32 128, 128
      %83 = vsyncadd [#allocation4], %s82
      %s85 = sshll.u32 [#allocation7], 4
      %s86 = int_to_ptr.vmem [resolvable:$true] %s85
      %88 = dma.vmem_to_hbm [thread:$0]  %s86, 128, %s2, [#allocation4]
    $region21: #{tpu_custom_call.1} parent=1 // pred_fallthru
      _
    // Predicated region
    $region22: #{tpu_custom_call.1} parent=1 // pred_check
      _
    $region23: #{tpu_custom_call.1} parent=1 // pred_check_branch
      %90 = sbr.rel (0) target = $region25
    $region24: #{tpu_custom_call.1} parent=1 // pred_region
      %91 = dma.done [#allocation4], 128
    $region25: #{tpu_custom_call.1} parent=1 // pred_fallthru
      _
    %92 = vsyncpa [#allocation3], 1
    %93 = vsyncpa [#allocation6], 1
    %94 = vsyncpa [#allocation4], 1

</llo_original>
